<compile_context>
chip_gen: v5e
topology: v5e:2x2
jax: 0.10.0
libtpu: 0.0.40
codegen_flags: <defaults>
</compile_context>

<pallas_src>
import functools

import jax
import jax.numpy as jnp
from jax.experimental import pallas as pl
from jax.experimental.pallas import tpu as pltpu

DIM_HIDDEN = 64
D = 10
DIM_INPUT = D + 1        # 11
DIM_OUTPUT = 1
NUM_LAYER = 3

K_PAD = 16               # padded input-feature dim (11 -> 16)
OUT_PAD = 128            # padded output dim (1 -> 128) => lane-dense stores


def _round_up(n, m):
    return ((n + m - 1) // m) * m


def _softplus(z):
    # matches torch.nn.Softplus(beta=1, threshold=20)
    return jnp.where(z > 20.0, z, jnp.log1p(jnp.exp(jnp.minimum(z, 20.0))))


def pinn_kernel(x_ref,
                w1_ref, b1_ref,
                w2_ref, b2_ref,
                w3_ref, b3_ref,
                w4_ref, b4_ref,
                o_ref, *, matmul_dtype):
    def layer(h, w_ref, b_ref):
        # matmul in matmul_dtype (bf16 on v6e/v7x); accumulate + bias in f32
        return jnp.dot(h.astype(matmul_dtype), w_ref[...],
                       preferred_element_type=jnp.float32) + b_ref[...]

    h = jnp.tanh(layer(x_ref[...], w1_ref, b1_ref))
    h = jnp.tanh(layer(h, w2_ref, b2_ref))
    h = jnp.tanh(layer(h, w3_ref, b3_ref))
    z = layer(h, w4_ref, b4_ref)
    o_ref[...] = _softplus(z)        # padded columns produce softplus(0); discarded in wrapper


@functools.partial(jax.jit, static_argnames=("block_b", "matmul_dtype"))
def pinn_forward(x, params, block_b=512, matmul_dtype=jnp.float32):
    B, din = x.shape
    (w1, b1), (w2, b2), (w3, b3), (w4, b4) = params

    # Effective batch tile: never larger than the (8-aligned) padded batch.
    bb = min(block_b, _round_up(B, 8))
    Bp = _round_up(B, bb)

    # Pad batch remainder + feature dim (11 -> 16); pad last layer 1 -> 128 cols.
    xp = jnp.pad(x, ((0, Bp - B), (0, K_PAD - din))).astype(matmul_dtype)
    w1p = jnp.pad(w1, ((0, K_PAD - din), (0, 0))).astype(matmul_dtype)
    w2c = w2.astype(matmul_dtype)
    w3c = w3.astype(matmul_dtype)
    w4p = jnp.pad(w4, ((0, 0), (0, OUT_PAD - DIM_OUTPUT))).astype(matmul_dtype)
    b4p = jnp.pad(b4, ((0, 0), (0, OUT_PAD - DIM_OUTPUT)))

    def full_spec(shape):
        # tiny weight/bias kept VMEM-resident for every batch tile
        return pl.BlockSpec(shape, lambda i: (0,) * len(shape))

    grid = (Bp // bb,)

    itemsize = jnp.dtype(matmul_dtype).itemsize
    flops = 2 * Bp * (K_PAD * DIM_HIDDEN
                      + (NUM_LAYER - 1) * DIM_HIDDEN * DIM_HIDDEN
                      + DIM_HIDDEN * OUT_PAD)
    transcendentals = Bp * (NUM_LAYER * DIM_HIDDEN + 2 * OUT_PAD)
    weight_bytes = ((w1p.size + w2c.size + w3c.size + w4p.size) * itemsize
                    + (b1.size + b2.size + b3.size + b4p.size) * 4)
    bytes_accessed = xp.size * itemsize + Bp * OUT_PAD * 4 + weight_bytes

    out = pl.pallas_call(
        functools.partial(pinn_kernel, matmul_dtype=matmul_dtype),
        out_shape=jax.ShapeDtypeStruct((Bp, OUT_PAD), jnp.float32),
        grid_spec=pltpu.PrefetchScalarGridSpec(
            num_scalar_prefetch=0,
            grid=grid,
            in_specs=[
                pl.BlockSpec((bb, K_PAD), lambda i: (i, 0)),
                full_spec(w1p.shape), full_spec(b1.shape),
                full_spec(w2c.shape), full_spec(b2.shape),
                full_spec(w3c.shape), full_spec(b3.shape),
                full_spec(w4p.shape), full_spec(b4p.shape),
            ],
            out_specs=pl.BlockSpec((bb, OUT_PAD), lambda i: (i, 0)),
        ),
        compiler_params=pltpu.CompilerParams(
            dimension_semantics=("parallel",)),
        cost_estimate=pl.CostEstimate(
            flops=flops,
            transcendentals=transcendentals,
            bytes_accessed=bytes_accessed),
    )(xp, w1p, b1, w2c, b2, w3c, b3, w4p, b4p)

    # Drop padded output lanes / padded batch rows.
    return out[:B, :DIM_OUTPUT]


def init_params(key):
    """Deterministic init mimicking nn.Linear's default U(-1/sqrt(fan_in), 1/sqrt(fan_in))."""
    dims = [DIM_INPUT] + [DIM_HIDDEN] * NUM_LAYER + [DIM_OUTPUT]
    params = []
    for i in range(len(dims) - 1):
        fan_in, fan_out = dims[i], dims[i + 1]
        key, kw, kb = jax.random.split(key, 3)
        bound = 1.0 / (fan_in ** 0.5)
        w = jax.random.uniform(kw, (fan_in, fan_out), jnp.float32, -bound, bound)
        b = jax.random.uniform(kb, (1, fan_out), jnp.float32, -bound, bound)
        params.append((w, b))
    return params


def reference_forward(x, params):
    h = x
    for i, (w, b) in enumerate(params):
        h = h @ w + b
        h = jnp.tanh(h) if i < len(params) - 1 else _softplus(h)
    return h


if __name__ == "__main__":
    key = jax.random.PRNGKey(0)
    key, kx1, kx2 = jax.random.split(key, 3)
    params = init_params(key)

    # Small, even batch (single tile), exact f32 semantics.
    x_small = jax.random.normal(kx1, (16, DIM_INPUT), jnp.float32)
    out = jax.block_until_ready(pinn_forward(x_small, params))
    ref = reference_forward(x_small, params)
    assert out.shape == (16, DIM_OUTPUT)
    assert jnp.allclose(out, ref, atol=1e-5, rtol=1e-5), "f32 mismatch vs pure-JAX reference"

    # Multi-tile grid with a remainder batch (exercises cdiv + zero-pad path).
    x_big = jax.random.normal(kx2, (300, DIM_INPUT), jnp.float32)
    out_big = jax.block_until_ready(pinn_forward(x_big, params, block_b=128))
    ref_big = reference_forward(x_big, params)
    assert out_big.shape == (300, DIM_OUTPUT)
    assert jnp.allclose(out_big, ref_big, atol=1e-5, rtol=1e-5), "remainder-path mismatch"

    # bf16-matmul variant (v6e/v7x MXU path); f32 accumulation keeps it close to f32.
    out_bf16 = jax.block_until_ready(
        pinn_forward(x_small, params, matmul_dtype=jnp.bfloat16))
    assert out_bf16.shape == (16, DIM_OUTPUT)
    assert jnp.allclose(out_bf16, ref, atol=1e-1, rtol=1e-1), "bf16 path mismatch"

    print("KERNEL_OK")
</pallas_src>

<mosaic_0001>
module attributes {stable_mosaic.version = 11 : i64} {
  func.func @pinn_kernel(%arg0: i32, %arg1: memref<16x16xf32, #tpu.memory_space<vmem>>, %arg2: memref<16x64xf32, #tpu.memory_space<vmem>>, %arg3: memref<1x64xf32, #tpu.memory_space<vmem>>, %arg4: memref<64x64xf32, #tpu.memory_space<vmem>>, %arg5: memref<1x64xf32, #tpu.memory_space<vmem>>, %arg6: memref<64x64xf32, #tpu.memory_space<vmem>>, %arg7: memref<1x64xf32, #tpu.memory_space<vmem>>, %arg8: memref<64x128xf32, #tpu.memory_space<vmem>>, %arg9: memref<1x128xf32, #tpu.memory_space<vmem>>, %arg10: memref<16x128xf32, #tpu.memory_space<vmem>>) attributes {dimension_semantics = [#tpu.dimension_semantics<parallel>], iteration_bounds = array<i64: 1>, scalar_prefetch = 0 : i64, scratch_operands = 0 : i64, tpu.core_type = #tpu.core_type<tc>, window_params = [{transform_indices = @transform_0, window_bounds = array<i64: 16, 16>}, {pipeline_mode = #tpu.pipeline_mode<synchronous>, transform_indices = @transform_1, window_bounds = array<i64: 16, 64>}, {pipeline_mode = #tpu.pipeline_mode<synchronous>, transform_indices = @transform_2, window_bounds = array<i64: 1, 64>}, {pipeline_mode = #tpu.pipeline_mode<synchronous>, transform_indices = @transform_3, window_bounds = array<i64: 64, 64>}, {pipeline_mode = #tpu.pipeline_mode<synchronous>, transform_indices = @transform_4, window_bounds = array<i64: 1, 64>}, {pipeline_mode = #tpu.pipeline_mode<synchronous>, transform_indices = @transform_5, window_bounds = array<i64: 64, 64>}, {pipeline_mode = #tpu.pipeline_mode<synchronous>, transform_indices = @transform_6, window_bounds = array<i64: 1, 64>}, {pipeline_mode = #tpu.pipeline_mode<synchronous>, transform_indices = @transform_7, window_bounds = array<i64: 64, 128>}, {pipeline_mode = #tpu.pipeline_mode<synchronous>, transform_indices = @transform_8, window_bounds = array<i64: 1, 128>}, {transform_indices = @transform_9, window_bounds = array<i64: 16, 128>}]} {
    %c0 = arith.constant 0 : index
    %c0_0 = arith.constant 0 : index
    %0 = vector.load %arg1[%c0, %c0_0] : memref<16x16xf32, #tpu.memory_space<vmem>>, vector<16x16xf32>
    %c0_1 = arith.constant 0 : index
    %c0_2 = arith.constant 0 : index
    %1 = vector.load %arg2[%c0_1, %c0_2] : memref<16x64xf32, #tpu.memory_space<vmem>>, vector<16x64xf32>
    %cst = arith.constant dense<0.000000e+00> : vector<16x64xf32>
    %2 = tpu.matmul %0, %1, %cst {dimension_numbers = #tpu.dot_dimension_numbers<[1], [0], [0], [1], [0, 0, 1, 1], [], []>} : vector<16x16xf32>, vector<16x64xf32>, vector<16x64xf32> -> vector<16x64xf32>
    %c0_3 = arith.constant 0 : index
    %c0_4 = arith.constant 0 : index
    %3 = vector.load %arg3[%c0_3, %c0_4] : memref<1x64xf32, #tpu.memory_space<vmem>>, vector<1x64xf32>
    %4 = vector.broadcast %3 : vector<1x64xf32> to vector<16x64xf32>
    %5 = arith.addf %2, %4 : vector<16x64xf32>
    %6 = math.tanh %5 : vector<16x64xf32>
    %c0_5 = arith.constant 0 : index
    %c0_6 = arith.constant 0 : index
    %7 = vector.load %arg4[%c0_5, %c0_6] : memref<64x64xf32, #tpu.memory_space<vmem>>, vector<64x64xf32>
    %cst_7 = arith.constant dense<0.000000e+00> : vector<16x64xf32>
    %8 = tpu.matmul %6, %7, %cst_7 {dimension_numbers = #tpu.dot_dimension_numbers<[1], [0], [0], [1], [0, 0, 1, 1], [], []>} : vector<16x64xf32>, vector<64x64xf32>, vector<16x64xf32> -> vector<16x64xf32>
    %c0_8 = arith.constant 0 : index
    %c0_9 = arith.constant 0 : index
    %9 = vector.load %arg5[%c0_8, %c0_9] : memref<1x64xf32, #tpu.memory_space<vmem>>, vector<1x64xf32>
    %10 = vector.broadcast %9 : vector<1x64xf32> to vector<16x64xf32>
    %11 = arith.addf %8, %10 : vector<16x64xf32>
    %12 = math.tanh %11 : vector<16x64xf32>
    %c0_10 = arith.constant 0 : index
    %c0_11 = arith.constant 0 : index
    %13 = vector.load %arg6[%c0_10, %c0_11] : memref<64x64xf32, #tpu.memory_space<vmem>>, vector<64x64xf32>
    %cst_12 = arith.constant dense<0.000000e+00> : vector<16x64xf32>
    %14 = tpu.matmul %12, %13, %cst_12 {dimension_numbers = #tpu.dot_dimension_numbers<[1], [0], [0], [1], [0, 0, 1, 1], [], []>} : vector<16x64xf32>, vector<64x64xf32>, vector<16x64xf32> -> vector<16x64xf32>
    %c0_13 = arith.constant 0 : index
    %c0_14 = arith.constant 0 : index
    %15 = vector.load %arg7[%c0_13, %c0_14] : memref<1x64xf32, #tpu.memory_space<vmem>>, vector<1x64xf32>
    %16 = vector.broadcast %15 : vector<1x64xf32> to vector<16x64xf32>
    %17 = arith.addf %14, %16 : vector<16x64xf32>
    %18 = math.tanh %17 : vector<16x64xf32>
    %c0_15 = arith.constant 0 : index
    %c0_16 = arith.constant 0 : index
    %19 = vector.load %arg8[%c0_15, %c0_16] : memref<64x128xf32, #tpu.memory_space<vmem>>, vector<64x128xf32>
    %cst_17 = arith.constant dense<0.000000e+00> : vector<16x128xf32>
    %20 = tpu.matmul %18, %19, %cst_17 {dimension_numbers = #tpu.dot_dimension_numbers<[1], [0], [0], [1], [0, 0, 1, 1], [], []>} : vector<16x64xf32>, vector<64x128xf32>, vector<16x128xf32> -> vector<16x128xf32>
    %c0_18 = arith.constant 0 : index
    %c0_19 = arith.constant 0 : index
    %21 = vector.load %arg9[%c0_18, %c0_19] : memref<1x128xf32, #tpu.memory_space<vmem>>, vector<1x128xf32>
    %22 = vector.broadcast %21 : vector<1x128xf32> to vector<16x128xf32>
    %23 = arith.addf %20, %22 : vector<16x128xf32>
    %cst_20 = arith.constant 2.000000e+01 : f32
    %24 = vector.broadcast %cst_20 : f32 to vector<16x128xf32>
    %25 = arith.cmpf ogt, %23, %24 : vector<16x128xf32>
    %cst_21 = arith.constant 2.000000e+01 : f32
    %26 = vector.broadcast %cst_21 : f32 to vector<16x128xf32>
    %27 = arith.minimumf %23, %26 : vector<16x128xf32>
    %28 = math.exp %27 : vector<16x128xf32>
    %29 = math.log1p %28 : vector<16x128xf32>
    %30 = arith.select %25, %23, %29 : vector<16x128xi1>, vector<16x128xf32>
    %c0_22 = arith.constant 0 : index
    %c0_23 = arith.constant 0 : index
    %31 = vector.load %arg10[%c0_22, %c0_23] : memref<16x128xf32, #tpu.memory_space<vmem>>, vector<16x128xf32>
    tpu.vector_store %arg10[%c0_22, %c0_23], %30 {strides = array<i32>} : memref<16x128xf32, #tpu.memory_space<vmem>>, vector<16x128xf32>,
    return
  }
  func.func @transform_0(%arg0: i32) -> (i32, i32) {
    %c0_i32 = arith.constant 0 : i32
    %c0_i32_0 = arith.constant 0 : i32
    return %arg0, %c0_i32 : i32, i32
  }
  func.func @transform_1(%arg0: i32) -> (i32, i32) {
    %c0_i32 = arith.constant 0 : i32
    %c0_i32_0 = arith.constant 0 : i32
    %c0_i32_1 = arith.constant 0 : i32
    return %c0_i32, %c0_i32_0 : i32, i32
  }
  func.func @transform_2(%arg0: i32) -> (i32, i32) {
    %c0_i32 = arith.constant 0 : i32
    %c0_i32_0 = arith.constant 0 : i32
    %c0_i32_1 = arith.constant 0 : i32
    return %c0_i32, %c0_i32_0 : i32, i32
  }
  func.func @transform_3(%arg0: i32) -> (i32, i32) {
    %c0_i32 = arith.constant 0 : i32
    %c0_i32_0 = arith.constant 0 : i32
    %c0_i32_1 = arith.constant 0 : i32
    return %c0_i32, %c0_i32_0 : i32, i32
  }
  func.func @transform_4(%arg0: i32) -> (i32, i32) {
    %c0_i32 = arith.constant 0 : i32
    %c0_i32_0 = arith.constant 0 : i32
    %c0_i32_1 = arith.constant 0 : i32
    return %c0_i32, %c0_i32_0 : i32, i32
  }
  func.func @transform_5(%arg0: i32) -> (i32, i32) {
    %c0_i32 = arith.constant 0 : i32
    %c0_i32_0 = arith.constant 0 : i32
    %c0_i32_1 = arith.constant 0 : i32
    return %c0_i32, %c0_i32_0 : i32, i32
  }
  func.func @transform_6(%arg0: i32) -> (i32, i32) {
    %c0_i32 = arith.constant 0 : i32
    %c0_i32_0 = arith.constant 0 : i32
    %c0_i32_1 = arith.constant 0 : i32
    return %c0_i32, %c0_i32_0 : i32, i32
  }
  func.func @transform_7(%arg0: i32) -> (i32, i32) {
    %c0_i32 = arith.constant 0 : i32
    %c0_i32_0 = arith.constant 0 : i32
    %c0_i32_1 = arith.constant 0 : i32
    return %c0_i32, %c0_i32_0 : i32, i32
  }
  func.func @transform_8(%arg0: i32) -> (i32, i32) {
    %c0_i32 = arith.constant 0 : i32
    %c0_i32_0 = arith.constant 0 : i32
    %c0_i32_1 = arith.constant 0 : i32
    return %c0_i32, %c0_i32_0 : i32, i32
  }
  func.func @transform_9(%arg0: i32) -> (i32, i32) {
    %c0_i32 = arith.constant 0 : i32
    %c0_i32_0 = arith.constant 0 : i32
    return %arg0, %c0_i32 : i32, i32
  }
}

</mosaic_0001>

<llo_original>
// kernel: pinn_forward.1
$region0: #{pinn_forward.1}
  #allocation0 [shape = 'u32[]', space=smem, size = 0x4, offset = 0x4, fixed_abs, tag = 'smem constant byte address 0x4 - core index']
  #allocation1 [shape = 'u32[72,128]{1,0:T(1,128)}', space=vmem, size = 0x9000, scoped, tag = 'internal scratch']
  %s0 = inlined_call_operand.vmem [shape: f32[16,16], index: 0, kind: input, shape index: {}]
  %s1 = inlined_call_operand.vmem [shape: f32[16,64], index: 1, kind: input, shape index: {}]
  %s2 = inlined_call_operand.vmem [shape: f32[1,64], index: 2, kind: input, shape index: {}]
  %s3 = inlined_call_operand.vmem [shape: f32[64,64], index: 3, kind: input, shape index: {}]
  %s4 = inlined_call_operand.vmem [shape: f32[1,64], index: 4, kind: input, shape index: {}]
  %s5 = inlined_call_operand.vmem [shape: f32[64,64], index: 5, kind: input, shape index: {}]
  %s6 = inlined_call_operand.vmem [shape: f32[1,64], index: 6, kind: input, shape index: {}]
  %s7 = inlined_call_operand.vmem [shape: f32[64,128], index: 7, kind: input, shape index: {}]
  %s8 = inlined_call_operand.vmem [shape: f32[1,128], index: 8, kind: input, shape index: {}]
  %s9 = inlined_call_operand.vmem [shape: f32[16,128], index: 9, kind: output, shape index: {}]
  %s10 = sld [smem:[#allocation0]]
  $region46: #{pinn_forward.1} parent=0
    _
  %s12 = ssub.s32 1, %s10
  %s13 = scalar_select 0, %s12, %s10
  // Predicated region
  $region2: #{pinn_forward.1} parent=0 // pred_check
    _
  $region3: #{pinn_forward.1} parent=0 // pred_check_branch
    %15 = sbr.rel (0) target = $region5
  $region4: #{pinn_forward.1} parent=0 // pred_region
    _
  $region5: #{pinn_forward.1} parent=0 // pred_fallthru
    _
  // Predicated region
  $region6: #{pinn_forward.1} parent=0 // pred_check
    _
  $region7: #{pinn_forward.1} parent=0 // pred_check_branch
    %17 = sbr.rel (0) target = $region9
  $region8: #{pinn_forward.1} parent=0 // pred_region
    _
  $region9: #{pinn_forward.1} parent=0 // pred_fallthru
    _
  // Predicated region
  $region10: #{pinn_forward.1} parent=0 // pred_check
    _
  $region11: #{pinn_forward.1} parent=0 // pred_check_branch
    %19 = sbr.rel (0) target = $region13
  $region12: #{pinn_forward.1} parent=0 // pred_region
    _
  $region13: #{pinn_forward.1} parent=0 // pred_fallthru
    _
  // Predicated region
  $region14: #{pinn_forward.1} parent=0 // pred_check
    _
  $region15: #{pinn_forward.1} parent=0 // pred_check_branch
    %21 = sbr.rel (0) target = $region17
  $region16: #{pinn_forward.1} parent=0 // pred_region
    _
  $region17: #{pinn_forward.1} parent=0 // pred_fallthru
    _
  // Predicated region
  $region18: #{pinn_forward.1} parent=0 // pred_check
    _
  $region19: #{pinn_forward.1} parent=0 // pred_check_branch
    %23 = sbr.rel (0) target = $region21
  $region20: #{pinn_forward.1} parent=0 // pred_region
    _
  $region21: #{pinn_forward.1} parent=0 // pred_fallthru
    _
  // Predicated region
  $region22: #{pinn_forward.1} parent=0 // pred_check
    _
  $region23: #{pinn_forward.1} parent=0 // pred_check_branch
    %25 = sbr.rel (0) target = $region25
  $region24: #{pinn_forward.1} parent=0 // pred_region
    _
  $region25: #{pinn_forward.1} parent=0 // pred_fallthru
    _
  // Predicated region
  $region26: #{pinn_forward.1} parent=0 // pred_check
    _
  $region27: #{pinn_forward.1} parent=0 // pred_check_branch
    %27 = sbr.rel (0) target = $region29
  $region28: #{pinn_forward.1} parent=0 // pred_region
    _
  $region29: #{pinn_forward.1} parent=0 // pred_fallthru
    _
  // Predicated region
  $region30: #{pinn_forward.1} parent=0 // pred_check
    _
  $region31: #{pinn_forward.1} parent=0 // pred_check_branch
    %29 = sbr.rel (0) target = $region33
  $region32: #{pinn_forward.1} parent=0 // pred_region
    _
  $region33: #{pinn_forward.1} parent=0 // pred_fallthru
    _
  // Predicated region
  $region34: #{pinn_forward.1} parent=0 // pred_check
    _
  $region35: #{pinn_forward.1} parent=0 // pred_check_branch
    %31 = sbr.rel (0) target = $region37
  $region36: #{pinn_forward.1} parent=0 // pred_region
    _
  $region37: #{pinn_forward.1} parent=0 // pred_fallthru
    _
  %v32 = vld [vmem:[%s0] sm:$0xff]
  %v33 = vld [vmem:[%s0 + $0x8] sm:$0xff]
  %v34 = vld [vmem:[%s1] sm:$0xff]
  %v35 = vld [vmem:[%s1 + $0x8] sm:$0xff]
  %v36 = vld [vmem:[%s2] sm:$0x1]
  %v38 = vperm.slane %v36, 0
  %vm40 = vcmask 130048
  %v42 = vsel %vm40, %v32, 0
  %v45 = vsel %vm40, %v33, 0
  %47 = vmatpush.msra.mxu0 0.0
  %48 = vmatpush.msra.mxu0 0.0
  %49 = vmatpush.msra.mxu0 0.0
  %50 = vmatpush.msra.mxu0 0.0
  %51 = vmatpush.msra.mxu0 0.0
  %52 = vmatpush.msra.mxu0 0.0
  %53 = vmatpush.msra.mxu0 0.0
  %54 = vmatpush.msra.mxu0 0.0
  %55 = vmatpush.msra.mxu0 0.0
  %56 = vmatpush.msra.mxu0 0.0
  %57 = vmatpush.msra.mxu0 0.0
  %58 = vmatpush.msra.mxu0 0.0
  %59 = vmatpush.msra.mxu0 0.0
  %60 = vmatpush.msra.mxu0 0.0
  %61 = vmatpush.msra.mxu0 %v35
  %62 = vmatpush.msra.mxu0 %v34
  %63 = vmatmul.f32.gmra.mxu0 %v42
  %v64 = vpop.f32.mrf.mxu0
  %v65 = vadd.f32 %v38, %v64
  %66 = vmatmul.f32.gmra.mxu0 %v45
  %v67 = vpop.f32.mrf.mxu0
  %v68 = vadd.f32 %v38, %v67
  %69 = vdwg.mxu0
  %v70 = vtanh.pop %v65
  %v71 = vtanh.pop %v68
  %v72 = vld [vmem:[%s3] sm:$0xff]
  %v73 = vld [vmem:[%s3 + $0x8] sm:$0xff]
  %v74 = vld [vmem:[%s3 + $0x10] sm:$0xff]
  %v75 = vld [vmem:[%s3 + $0x18] sm:$0xff]
  %v76 = vld [vmem:[%s3 + $0x20] sm:$0xff]
  %v77 = vld [vmem:[%s3 + $0x28] sm:$0xff]
  %v78 = vld [vmem:[%s3 + $0x30] sm:$0xff]
  %v79 = vld [vmem:[%s3 + $0x38] sm:$0xff]
  %v80 = vld [vmem:[%s4] sm:$0x1]
  %v82 = vperm.slane %v80, 0
  %vm84 = vcmask 523264
  %v86 = vsel %vm84, %v70, 0
  %v89 = vsel %vm84, %v71, 0
  %91 = vmatpush.msra.mxu0 0.0
  %92 = vmatpush.msra.mxu0 0.0
  %93 = vmatpush.msra.mxu0 0.0
  %94 = vmatpush.msra.mxu0 0.0
  %95 = vmatpush.msra.mxu0 0.0
  %96 = vmatpush.msra.mxu0 0.0
  %97 = vmatpush.msra.mxu0 0.0
  %98 = vmatpush.msra.mxu0 0.0
  %99 = vmatpush.msra.mxu0 %v79
  %100 = vmatpush.msra.mxu0 %v78
  %101 = vmatpush.msra.mxu0 %v77
  %102 = vmatpush.msra.mxu0 %v76
  %103 = vmatpush.msra.mxu0 %v75
  %104 = vmatpush.msra.mxu0 %v74
  %105 = vmatpush.msra.mxu0 %v73
  %106 = vmatpush.msra.mxu0 %v72
  %107 = vmatmul.f32.gmra.mxu0 %v86
  %v108 = vpop.f32.mrf.mxu0
  %v109 = vadd.f32 %v82, %v108
  %110 = vmatmul.f32.gmra.mxu0 %v89
  %v111 = vpop.f32.mrf.mxu0
  %v112 = vadd.f32 %v82, %v111
  %113 = vdwg.mxu0
  %v114 = vtanh.pop %v109
  %v115 = vtanh.pop %v112
  %v116 = vld [vmem:[%s5] sm:$0xff]
  %v117 = vld [vmem:[%s5 + $0x8] sm:$0xff]
  %v118 = vld [vmem:[%s5 + $0x10] sm:$0xff]
  %v119 = vld [vmem:[%s5 + $0x18] sm:$0xff]
  %v120 = vld [vmem:[%s5 + $0x20] sm:$0xff]
  %v121 = vld [vmem:[%s5 + $0x28] sm:$0xff]
  %v122 = vld [vmem:[%s5 + $0x30] sm:$0xff]
  %v123 = vld [vmem:[%s5 + $0x38] sm:$0xff]
  %v124 = vld [vmem:[%s6] sm:$0x1]
  %v126 = vperm.slane %v124, 0
  %v129 = vsel %vm84, %v114, 0
  %v132 = vsel %vm84, %v115, 0
  %134 = vmatpush.msra.mxu0 0.0
  %135 = vmatpush.msra.mxu0 0.0
  %136 = vmatpush.msra.mxu0 0.0
  %137 = vmatpush.msra.mxu0 0.0
  %138 = vmatpush.msra.mxu0 0.0
  %139 = vmatpush.msra.mxu0 0.0
  %140 = vmatpush.msra.mxu0 0.0
  %141 = vmatpush.msra.mxu0 0.0
  %142 = vmatpush.msra.mxu0 %v123
  %143 = vmatpush.msra.mxu0 %v122
  %144 = vmatpush.msra.mxu0 %v121
  %145 = vmatpush.msra.mxu0 %v120
  %146 = vmatpush.msra.mxu0 %v119
  %147 = vmatpush.msra.mxu0 %v118
  %148 = vmatpush.msra.mxu0 %v117
  %149 = vmatpush.msra.mxu0 %v116
  %150 = vmatmul.f32.gmra.mxu0 %v129
  %v151 = vpop.f32.mrf.mxu0
  %v152 = vadd.f32 %v126, %v151
  %153 = vmatmul.f32.gmra.mxu0 %v132
  %v154 = vpop.f32.mrf.mxu0
  %v155 = vadd.f32 %v126, %v154
  %156 = vdwg.mxu0
  %v157 = vtanh.pop %v152
  %v158 = vtanh.pop %v155
  %v159 = vld [vmem:[%s7] sm:$0xff]
  %v160 = vld [vmem:[%s7 + $0x8] sm:$0xff]
  %v161 = vld [vmem:[%s7 + $0x10] sm:$0xff]
  %v162 = vld [vmem:[%s7 + $0x18] sm:$0xff]
  %v163 = vld [vmem:[%s7 + $0x20] sm:$0xff]
  %v164 = vld [vmem:[%s7 + $0x28] sm:$0xff]
  %v165 = vld [vmem:[%s7 + $0x30] sm:$0xff]
  %v166 = vld [vmem:[%s7 + $0x38] sm:$0xff]
  %v167 = vld [vmem:[%s8] sm:$0x1]
  %v169 = vperm.slane %v167, 0
  %v172 = vsel %vm84, %v157, 0
  %v175 = vsel %vm84, %v158, 0
  %177 = vmatpush.msra.mxu0 0.0
  %178 = vmatpush.msra.mxu0 0.0
  %179 = vmatpush.msra.mxu0 0.0
  %180 = vmatpush.msra.mxu0 0.0
  %181 = vmatpush.msra.mxu0 0.0
  %182 = vmatpush.msra.mxu0 0.0
  %183 = vmatpush.msra.mxu0 0.0
  %184 = vmatpush.msra.mxu0 0.0
  %185 = vmatpush.msra.mxu0 %v166
  %186 = vmatpush.msra.mxu0 %v165
  %187 = vmatpush.msra.mxu0 %v164
  %188 = vmatpush.msra.mxu0 %v163
  %189 = vmatpush.msra.mxu0 %v162
  %190 = vmatpush.msra.mxu0 %v161
  %191 = vmatpush.msra.mxu0 %v160
  %192 = vmatpush.msra.mxu0 %v159
  %193 = vmatmul.f32.gmra.mxu0 %v172
  %v194 = vpop.f32.mrf.mxu0
  %v195 = vadd.f32 %v169, %v194
  %196 = vmatmul.f32.gmra.mxu0 %v175
  %v197 = vpop.f32.mrf.mxu0
  %v198 = vadd.f32 %v169, %v197
  %199 = vdwg.mxu0
  %vm200 = vcmp.gt.f32.partialorder %v195, 20.0
  %vm201 = vcmp.gt.f32.partialorder %v198, 20.0
  %v202 = vmin.f32 %v195, 20.0
  %v203 = vmin.f32 %v198, 20.0
  %v204 = vmul.f32 %v202, 1.442695
  %v205 = vpow.pop %v204
  %v206 = vmul.f32 %v203, 1.442695
  %v207 = vpow.pop %v206
  %v208 = vadd.f32 %v205, 1.0
  %v209 = vlog2.pop %v208
  %v210 = vmul.f32 %v209, 0.6931472
  %v211 = vmul.f32 -0.5, %v205
  %v212 = vadd.f32 %v211, 1.0
  %v213 = vmul.f32 %v212, %v205
  %v214 = vand.u32 2147483647, %v205
  %vm215 = vcmp.lt.f32.partialorder %v214, 0.0004427343
  %v216 = vsel %vm215, %v213, %v210
  %v217 = vadd.f32 %v207, 1.0
  %v218 = vlog2.pop %v217
  %v219 = vmul.f32 %v218, 0.6931472
  %v220 = vmul.f32 -0.5, %v207
  %v221 = vadd.f32 %v220, 1.0
  %v222 = vmul.f32 %v221, %v207
  %v223 = vand.u32 2147483647, %v207
  %vm224 = vcmp.lt.f32.partialorder %v223, 0.0004427343
  %v225 = vsel %vm224, %v222, %v219
  %v226 = vsel %vm200, %v195, %v216
  %v227 = vsel %vm201, %v198, %v225
  %228 = vst [vmem:[%s9] sm:$0xff] %v226
  %229 = vst [vmem:[%s9 + $0x8] sm:$0xff] %v227
  // Predicated region
  $region38: #{pinn_forward.1} parent=0 // pred_check
    _
  $region39: #{pinn_forward.1} parent=0 // pred_check_branch
    %231 = sbr.rel (0) target = $region41
  $region40: #{pinn_forward.1} parent=0 // pred_region
    _
  $region41: #{pinn_forward.1} parent=0 // pred_fallthru
    _
  // Predicated region
  $region42: #{pinn_forward.1} parent=0 // pred_check
    _
  $region43: #{pinn_forward.1} parent=0 // pred_check_branch
    %233 = sbr.rel (0) target = $region45
  $region44: #{pinn_forward.1} parent=0 // pred_region
    _
  $region45: #{pinn_forward.1} parent=0 // pred_fallthru
    _

</llo_original>
